<compile_context>
chip_gen: v5e
topology: v5e:2x2
jax: 0.10.0
libtpu: 0.0.40
codegen_flags: <defaults>
</compile_context>

<pallas_src>
import math

import jax
import jax.numpy as jnp
from jax.experimental import pallas as pl
from jax.experimental.pallas import tpu as pltpu


_TARGET_BLOCK_BYTES = 4 * 1024 * 1024     # target size of one x block (~2-4 MiB sweet spot)
_MIN_GRID_STEPS = 4                       # >=4 steps -> both v7x TCs get >=2 tiles each
_MIN_SPLIT_BYTES = 4 * 1024 * 1024        # only force splitting for non-trivial inputs


def _vmem_limits():
    """Generation-aware scoped-VMEM limit and double-buffered tile budget."""
    cap = 64 * 1024 * 1024                # conservative fallback (v7x physical VMEM)
    try:
        info = pltpu.get_tpu_info()
        cap = int(getattr(info, "vmem_capacity_bytes", cap)) or cap
    except Exception:
        pass
    limit = min(max(cap // 2, 32 * 1024 * 1024), 64 * 1024 * 1024)  # 32 MiB on v7x, 64 MiB on v5e/v6e
    tile_budget = (limit * 3) // 4                                   # headroom for Mosaic internals
    return limit, tile_budget


def _sublane_multiple(dtype):
    """Native sublane tile for the dtype: 8 (f32), 16 (bf16), 32 (int8/fp8)."""
    return max(8, 32 // jnp.dtype(dtype).itemsize)


def _build_pe(d_model: int, max_len: int = 5000, dtype=jnp.float32) -> jnp.ndarray:
    """Deterministic sinusoidal positional-encoding table, shape (1, max_len, d_model)."""
    position = jnp.arange(0, max_len, dtype=jnp.float32)[:, None]            # (max_len, 1)
    div_term = jnp.exp(
        jnp.arange(0, d_model, 2, dtype=jnp.float32) * (-math.log(10000.0) / d_model)
    )                                                                        # (ceil(d/2),)
    angles = position * div_term                                             # (max_len, ceil(d/2))
    pe = jnp.zeros((max_len, d_model), dtype=jnp.float32)
    pe = pe.at[:, 0::2].set(jnp.sin(angles))
    pe = pe.at[:, 1::2].set(jnp.cos(angles[:, : d_model // 2]))              # odd d_model safe
    return pe[None, :, :].astype(dtype)                                      # (1, max_len, d_model)


def _add_pe_kernel(x_ref, pe_ref, o_ref):
    # x_ref: (tb, ts, D) or (tb, tf); pe_ref: (1, ts, D) or (1, tf).
    # Broadcast add over the leading (batch) axis — pe is DMA'd once per tile.
    o_ref[...] = x_ref[...] + pe_ref[...]


def _cost_estimate(B, S, D, itemsize):
    return pl.CostEstimate(
        flops=B * S * D,
        transcendentals=0,
        bytes_accessed=(2 * B * S * D + S * D) * itemsize,
    )


def _forward_3d(x, pe, *, vmem_limit, tile_budget):
    """Path for lane-aligned d_model (D % 128 == 0). Grid = (batch tiles, seq tiles)."""
    B, S, D = x.shape
    itemsize = x.dtype.itemsize
    sub = _sublane_multiple(x.dtype)

    tb = min(B, 16)                                   # batch tile: keeps seq tiles large for big B
    nb = pl.cdiv(B, tb)

    # Double-buffered bytes per sequence row: x + out blocks (tb rows each) + pe block (1 row).
    per_row = 2 * (2 * tb + 1) * D * itemsize
    ts_budget = max(sub, tile_budget // per_row)
    ts_target = max(sub, _TARGET_BLOCK_BYTES // max(1, tb * D * itemsize))
    ts = min(ts_budget, ts_target, S)

    # Guarantee enough grid steps for megacore sharding / pipelining on non-trivial inputs.
    total_bytes = 2 * B * S * D * itemsize
    if total_bytes >= _MIN_SPLIT_BYTES and nb < _MIN_GRID_STEPS:
        needed_ns = -(-_MIN_GRID_STEPS // nb)
        ts = min(ts, max(sub, -(-S // needed_ns)))

    pe_in = pe
    if ts >= S:
        if S % sub == 0:
            ts = S
        elif S > sub:
            ts = (S // sub) * sub                     # partial last tile; pe table stays unsliced
        else:
            ts = S                                    # tiny unaligned S: O(S*D) slice is negligible
            pe_in = pe[:, :S, :]
    else:
        ts = max(sub, (ts // sub) * sub)              # dtype-aware sublane alignment

    ns = pl.cdiv(S, ts)
    return pl.pallas_call(
        _add_pe_kernel,
        out_shape=jax.ShapeDtypeStruct((B, S, D), x.dtype),
        grid_spec=pltpu.PrefetchScalarGridSpec(
            num_scalar_prefetch=0,
            grid=(nb, ns),
            in_specs=[
                pl.BlockSpec((tb, ts, D), lambda b, s: (b, s, 0)),   # batch-tiled x
                pl.BlockSpec((1, ts, D), lambda b, s: (0, s, 0)),    # pe rows, reused across batch
            ],
            out_specs=pl.BlockSpec((tb, ts, D), lambda b, s: (b, s, 0)),
        ),
        cost_estimate=_cost_estimate(B, S, D, itemsize),
        compiler_params=pltpu.CompilerParams(
            dimension_semantics=("parallel", "parallel"),
            vmem_limit_bytes=vmem_limit,
        ),
    )(x, pe_in)


def _forward_flat(x, pe_flat, S, D, *, vmem_limit, tile_budget):
    """Path for D % 128 != 0: flatten (S, D) into one lane-dense trailing axis.

    pe_flat is the FULL flattened table (1, max_len*D), precomputed once; blocks are
    picked by index_map so no per-call slice of pe is materialized.
    """
    B = x.shape[0]
    itemsize = x.dtype.itemsize
    sub = _sublane_multiple(x.dtype)
    F = S * D
    x2 = x.reshape(B, F)                              # trailing-dim collapse: layout no-op

    tb = min(B, 64)                                   # sublane dim; 64 is a multiple of any sub
    nb = pl.cdiv(B, tb)
    tb_pad = -(-tb // sub) * sub                      # VMEM stores ceil(tb/sub)*sub sublanes

    # Double-buffered, sublane-padded bytes per lane column: x + out + pe blocks.
    per_col = 2 * (2 * tb_pad + sub) * itemsize
    tf_budget = max(128, tile_budget // per_col)
    tf_target = max(128, _TARGET_BLOCK_BYTES // (tb_pad * itemsize))
    tf = min(tf_budget, tf_target, F)

    total_bytes = 2 * B * F * itemsize
    if total_bytes >= _MIN_SPLIT_BYTES and nb < _MIN_GRID_STEPS:
        needed_nf = -(-_MIN_GRID_STEPS // nb)
        tf = min(tf, max(128, -(-F // needed_nf)))

    pe_in = pe_flat
    if tf >= F:
        if F % 128 == 0:
            tf = F
        elif F > 128:
            tf = (F // 128) * 128                     # partial last tile; flat pe stays unsliced
        else:
            tf = F                                    # tiny F: O(F) slice is negligible
            pe_in = pe_flat[:, :F]
    else:
        tf = max(128, (tf // 128) * 128)              # lane-aligned tile

    nf = pl.cdiv(F, tf)
    out2 = pl.pallas_call(
        _add_pe_kernel,
        out_shape=jax.ShapeDtypeStruct((B, F), x.dtype),
        grid_spec=pltpu.PrefetchScalarGridSpec(
            num_scalar_prefetch=0,
            grid=(nb, nf),
            in_specs=[
                pl.BlockSpec((tb, tf), lambda b, f: (b, f)),
                pl.BlockSpec((1, tf), lambda b, f: (0, f)),
            ],
            out_specs=pl.BlockSpec((tb, tf), lambda b, f: (b, f)),
        ),
        cost_estimate=_cost_estimate(B, S, D, itemsize),
        compiler_params=pltpu.CompilerParams(
            dimension_semantics=("parallel", "parallel"),
            vmem_limit_bytes=vmem_limit,
        ),
    )(x2, pe_in)
    return out2.reshape(B, S, D)


class PositionalEncoding:
    """Pallas-TPU port of the PyTorch module: forward(x) = x + pe[:, :x.shape[1], :]."""

    def __init__(self, d_model: int, max_len: int = 5000, dtype=jnp.float32):
        self.d_model = d_model
        self.max_len = max_len
        # Hot-path hoist: build + cast the table once at construction time.
        self.pe = _build_pe(d_model, max_len, dtype)                      # (1, max_len, d_model)
        # Precompute the flattened table for the lane-dense path (contiguous reshape, so
        # pe_flat[:, :S*D] == pe[:, :S, :].reshape(1, S*D) — no per-call slice needed).
        self.pe_flat = (
            self.pe.reshape(1, max_len * d_model) if d_model % 128 != 0 else None
        )
        self._vmem_limit, self._tile_budget = _vmem_limits()

    def __call__(self, x: jnp.ndarray) -> jnp.ndarray:
        B, S, D = x.shape
        if D != self.d_model:
            raise ValueError(f"d_model mismatch: {D} vs {self.d_model}")
        if S > self.max_len:
            raise ValueError(f"seq_len {S} exceeds max_len {self.max_len}")

        pe, pe_flat = self.pe, self.pe_flat
        if pe.dtype != x.dtype:
            # Fallback for an unexpected input dtype; the common case is hoisted to __init__.
            pe = pe.astype(x.dtype)
            pe_flat = pe.reshape(1, self.max_len * D) if D % 128 != 0 else None

        if D % 128 == 0:
            return _forward_3d(
                x, pe, vmem_limit=self._vmem_limit, tile_budget=self._tile_budget
            )
        return _forward_flat(
            x, pe_flat, S, D, vmem_limit=self._vmem_limit, tile_budget=self._tile_budget
        )


if __name__ == "__main__":
    key = jax.random.PRNGKey(0)
    k1, k2, k3 = jax.random.split(key, 3)
    max_len = 128

    # Case 1: small d_model (< 128) -> lane-dense flattened path.
    B, S, D = 2, 8, 32
    posenc1 = PositionalEncoding(D, max_len=max_len)
    x1 = jax.random.normal(k1, (B, S, D), dtype=jnp.float32)
    ref1 = x1 + posenc1.pe[:, :S, :]
    out1 = jax.block_until_ready(posenc1(x1))
    assert out1.shape == (B, S, D)
    assert jnp.allclose(out1, ref1, atol=1e-6), "mismatch vs reference (flat path)"

    # Case 2: lane-aligned d_model -> batch+seq tiled 3D path (pe reused across batch).
    D2, S2 = 128, 16
    posenc2 = PositionalEncoding(D2, max_len=max_len)
    x2 = jax.random.normal(k2, (B, S2, D2), dtype=jnp.float32)
    ref2 = x2 + posenc2.pe[:, :S2, :]
    out2 = jax.block_until_ready(posenc2(x2))
    assert out2.shape == (B, S2, D2)
    assert jnp.allclose(out2, ref2, atol=1e-6), "mismatch vs reference (3D path)"

    # Case 3: bf16 model dtype -> dtype-aware (16-row) sublane tiling.
    D3, S3 = 128, 32
    posenc3 = PositionalEncoding(D3, max_len=max_len, dtype=jnp.bfloat16)
    x3 = jax.random.normal(k3, (B, S3, D3), dtype=jnp.bfloat16)
    ref3 = x3 + posenc3.pe[:, :S3, :]
    out3 = jax.block_until_ready(posenc3(x3))
    assert out3.shape == (B, S3, D3)
    assert jnp.allclose(
        out3.astype(jnp.float32), ref3.astype(jnp.float32), atol=5e-2
    ), "mismatch vs reference (bf16 path)"

    print("KERNEL_OK")
</pallas_src>

<mosaic_0001>
module attributes {stable_mosaic.version = 11 : i64} {
  func.func @_add_pe_kernel(%arg0: i32, %arg1: i32, %arg2: memref<2x256xf32, #tpu.memory_space<vmem>>, %arg3: memref<1x256xf32, #tpu.memory_space<vmem>>, %arg4: memref<2x256xf32, #tpu.memory_space<vmem>>) attributes {dimension_semantics = [#tpu.dimension_semantics<parallel>, #tpu.dimension_semantics<parallel>], iteration_bounds = array<i64: 1, 1>, scalar_prefetch = 0 : i64, scratch_operands = 0 : i64, tpu.core_type = #tpu.core_type<tc>, window_params = [{transform_indices = @transform_0, window_bounds = array<i64: 2, 256>}, {transform_indices = @transform_1, window_bounds = array<i64: 1, 256>}, {transform_indices = @transform_2, window_bounds = array<i64: 2, 256>}]} {
    %c0 = arith.constant 0 : index
    %c0_0 = arith.constant 0 : index
    %0 = vector.load %arg2[%c0, %c0_0] : memref<2x256xf32, #tpu.memory_space<vmem>>, vector<2x256xf32>
    %c0_1 = arith.constant 0 : index
    %c0_2 = arith.constant 0 : index
    %1 = vector.load %arg3[%c0_1, %c0_2] : memref<1x256xf32, #tpu.memory_space<vmem>>, vector<1x256xf32>
    %2 = vector.broadcast %1 : vector<1x256xf32> to vector<2x256xf32>
    %3 = arith.addf %0, %2 : vector<2x256xf32>
    %c0_3 = arith.constant 0 : index
    %c0_4 = arith.constant 0 : index
    %4 = vector.load %arg4[%c0_3, %c0_4] : memref<2x256xf32, #tpu.memory_space<vmem>>, vector<2x256xf32>
    tpu.vector_store %arg4[%c0_3, %c0_4], %3 {strides = array<i32>} : memref<2x256xf32, #tpu.memory_space<vmem>>, vector<2x256xf32>,
    return
  }
  func.func @transform_0(%arg0: i32, %arg1: i32) -> (i32, i32) {
    %c0_i32 = arith.constant 0 : i32
    return %arg0, %arg1 : i32, i32
  }
  func.func @transform_1(%arg0: i32, %arg1: i32) -> (i32, i32) {
    %c0_i32 = arith.constant 0 : i32
    %c0_i32_0 = arith.constant 0 : i32
    return %c0_i32, %arg1 : i32, i32
  }
  func.func @transform_2(%arg0: i32, %arg1: i32) -> (i32, i32) {
    %c0_i32 = arith.constant 0 : i32
    return %arg0, %arg1 : i32, i32
  }
}

</mosaic_0001>

<llo_original>
// kernel: tpu_custom_call.1
$region0: #{tpu_custom_call.1}
  #allocation0 [shape = 'u32[]', space=smem, size = 0x4, offset = 0x4, fixed_abs, tag = 'smem constant byte address 0x4 - core index']
  #allocation1 [shape = 'u32[72,128]{1,0:T(1,128)}', space=vmem, size = 0x9000, scoped, tag = 'internal scratch']
  %s0 = inlined_call_operand.hbm [shape: f32[2,256], index: 0, kind: input, shape index: {}]
  %s1 = inlined_call_operand.hbm [shape: f32[1,4096], index: 1, kind: input, shape index: {}]
  %s2 = inlined_call_operand.hbm [shape: f32[2,256], index: 2, kind: output, shape index: {}]
  %s3 = sld [smem:[#allocation0]]
  $region26: #{tpu_custom_call.1} parent=0
    _
  %s5 = ssub.s32 1, %s3
  %s6 = scalar_select 0, %s5, %s3
  $region1: #{tpu_custom_call.1} parent=0
    #allocation2 [shape = 'u8[2048]{0}', space=vmem, size = 0x800, scoped, tag = 'input window, operand 0, single buffered']
    #allocation3 [shape = 's32[1]{0}', space=sflag, size = 0x4, scoped, tag = 'scoped memory for tpu_custom_call.1']
    #allocation4 [shape = 's32[1]{0}', space=sflag, size = 0x4, scoped, tag = 'scoped memory for tpu_custom_call.1']
    #allocation5 [shape = 'u8[1024]{0}', space=vmem, size = 0x400, scoped, tag = 'input window, operand 1, single buffered']
    #allocation6 [shape = 's32[1]{0}', space=sflag, size = 0x4, scoped, tag = 'scoped memory for tpu_custom_call.1']
    #allocation7 [shape = 'u8[2048]{0}', space=vmem, size = 0x800, scoped, tag = 'output window, operand 0, single buffered']
    %7 = vsyncpa [#allocation3], 0
    %8 = vsyncpa [#allocation6], 0
    %9 = vsyncpa [#allocation4], 0
    // Predicated region
    $region2: #{tpu_custom_call.1} parent=1 // pred_check
      _
    $region3: #{tpu_custom_call.1} parent=1 // pred_check_branch
      %11 = sbr.rel (0) target = $region5
    $region4: #{tpu_custom_call.1} parent=1 // pred_region
      %13 = vsyncadd [#allocation3], 0
      %s15 = sshll.u32 %s0, 4
      %s16 = int_to_ptr.hbm [resolvable:$true] %s15
      %s17 = sshll.u32 [#allocation2], 4
      %s18 = int_to_ptr.vmem [resolvable:$true] %s17
      %20 = dma.hbm_to_vmem [thread:$0]  %s16, 64, %s18, [#allocation3]
    $region5: #{tpu_custom_call.1} parent=1 // pred_fallthru
      _
    // Predicated region
    $region6: #{tpu_custom_call.1} parent=1 // pred_check
      _
    $region7: #{tpu_custom_call.1} parent=1 // pred_check_branch
      %22 = sbr.rel (0) target = $region9
    $region8: #{tpu_custom_call.1} parent=1 // pred_region
      %24 = vsyncadd [#allocation6], 0
      %s26 = sshll.u32 %s1, 4
      %s27 = int_to_ptr.hbm [resolvable:$true] %s26
      %s28 = sshll.u32 [#allocation5], 4
      %s29 = int_to_ptr.vmem [resolvable:$true] %s28
      %31 = dma.hbm_to_vmem [thread:$0]  %s27, 32, %s29, [#allocation6]
    $region9: #{tpu_custom_call.1} parent=1 // pred_fallthru
      _
    // Predicated region
    $region10: #{tpu_custom_call.1} parent=1 // pred_check
      _
    $region11: #{tpu_custom_call.1} parent=1 // pred_check_branch
      %33 = sbr.rel (0) target = $region13
    $region12: #{tpu_custom_call.1} parent=1 // pred_region
      %35 = dma.done [#allocation3], 64
    $region13: #{tpu_custom_call.1} parent=1 // pred_fallthru
      _
    // Predicated region
    $region14: #{tpu_custom_call.1} parent=1 // pred_check
      _
    $region15: #{tpu_custom_call.1} parent=1 // pred_check_branch
      %37 = sbr.rel (0) target = $region17
    $region16: #{tpu_custom_call.1} parent=1 // pred_region
      %39 = dma.done [#allocation6], 32
    $region17: #{tpu_custom_call.1} parent=1 // pred_fallthru
      _
    %v40 = vld [vmem:[#allocation2] sm:$0xf]
    %v41 = vld [vmem:[#allocation5] sm:$0x3]
    %v43 = vperm.slane %v41, 0
    %v44 = vperm.slane %v41, 1
    %v45 = vrot.slane %v44, 6
    %vm46 = vcmask 1041408
    %v47 = vsel %vm46, %v43, %v45
    %v49 = vadd.f32 %v40, %v47
    %50 = vst [vmem:[#allocation7] sm:$0xf] %v49
    // Predicated region
    $region18: #{tpu_custom_call.1} parent=1 // pred_check
      _
    $region19: #{tpu_custom_call.1} parent=1 // pred_check_branch
      %52 = sbr.rel (0) target = $region21
    $region20: #{tpu_custom_call.1} parent=1 // pred_region
      %54 = vsyncadd [#allocation4], 0
      %s56 = sshll.u32 [#allocation7], 4
      %s57 = int_to_ptr.vmem [resolvable:$true] %s56
      %s58 = sshll.u32 %s2, 4
      %s59 = int_to_ptr.hbm [resolvable:$true] %s58
      %61 = dma.vmem_to_hbm [thread:$0]  %s57, 64, %s59, [#allocation4]
    $region21: #{tpu_custom_call.1} parent=1 // pred_fallthru
      _
    // Predicated region
    $region22: #{tpu_custom_call.1} parent=1 // pred_check
      _
    $region23: #{tpu_custom_call.1} parent=1 // pred_check_branch
      %63 = sbr.rel (0) target = $region25
    $region24: #{tpu_custom_call.1} parent=1 // pred_region
      %65 = dma.done [#allocation4], 64
    $region25: #{tpu_custom_call.1} parent=1 // pred_fallthru
      _
    %66 = vsyncpa [#allocation3], 1
    %67 = vsyncpa [#allocation6], 1
    %68 = vsyncpa [#allocation4], 1

</llo_original>
